<compile_context>
chip_gen: v7x
topology: tpu7x:2x2x1
jax: 0.10.0
libtpu: 0.0.40
codegen_flags: <defaults>
</compile_context>

<pallas_src>
import functools

import numpy as np
import jax
import jax.numpy as jnp
from jax.experimental import pallas as pl
from jax.experimental.pallas import tpu as pltpu


def _dino_loss_kernel(inv_tt_ref, t_hbm_ref, s_ref, c_ref,        # inputs
                      loss_ref, tsum_ref,                          # outputs
                      t_raw, q_scr, acc_qs, acc_lse, copy_sem,     # scratch
                      *, ncrops, crops_per_step, B, inv_student_temp):
    step = pl.program_id(0)
    single_step = (crops_per_step == ncrops)

    # ---- step 0: copy raw teacher once (no dead double-buffer), teacher
    #      row-sum for the center update, fused teacher probs, acc init. ----
    @pl.when(step == 0)
    def _():
        cp = pltpu.make_async_copy(t_hbm_ref, t_raw, copy_sem)
        cp.start()
        cp.wait()
        traw = t_raw[...].astype(jnp.float32)                       # (2B, D)
        tsum_ref[...] = jnp.sum(traw, axis=0, keepdims=True)        # raw teacher sum
        t = (traw - c_ref[...].astype(jnp.float32)) * inv_tt_ref[0]
        t = t - jnp.max(t, axis=-1, keepdims=True)
        et = jnp.exp(t)
        q = et * (1.0 / jnp.sum(et, axis=-1, keepdims=True))        # exact reciprocal
        q0 = q[0:B, :]
        q_scr[0:B, :] = q0                                          # teacher crop 0
        q_scr[B:2 * B, :] = q0 + q[B:2 * B, :]                      # q_sum = q0 + q1
        acc_qs[...] = jnp.zeros_like(acc_qs)
        acc_lse[...] = jnp.zeros_like(acc_lse)

    def accumulate(q_weights, n_terms, sh, logz):
        # Deferred reduction: (8, D) partials via VPU adds only; the one
        # cross-lane/sublane XLU reduce happens on the final step.
        for i in range(B // 8):
            r = slice(i * 8, (i + 1) * 8)
            acc_qs[...] += q_weights[r, :] * sh[r, :]
        acc_lse[...] += float(n_terms) * logz

    # ---- per student crop: shifted logits + log-partition.  logp is never
    #      materialized: sum(q*logp) == sum(q*sh) - logZ (rows of q sum to 1).
    for j in range(crops_per_step):
        s = s_ref[j * B:(j + 1) * B, :].astype(jnp.float32) * inv_student_temp
        m = jnp.max(s, axis=-1, keepdims=True)                      # (B, 1)
        sh = s - m                                                  # (B, D)
        logz = jnp.log(jnp.sum(jnp.exp(sh), axis=-1, keepdims=True))  # (B, 1)
        q0 = q_scr[0:B, :]
        qsum = q_scr[B:2 * B, :]

        if single_step:
            v = j  # static crop id -> branch resolved at trace time
            if v == 0:
                accumulate(qsum - q0, 1, sh, logz)    # only teacher crop 1
            elif v == 1:
                accumulate(q0, 1, sh, logz)           # only teacher crop 0
            else:
                accumulate(qsum, 2, sh, logz)         # fused CE vs both crops
        else:
            v = step  # crops_per_step == 1

            @pl.when(v >= 2)
            def _():
                accumulate(qsum, 2, sh, logz)

            @pl.when(v == 0)
            def _():
                accumulate(qsum - q0, 1, sh, logz)

            @pl.when(v == 1)
            def _():
                accumulate(q0, 1, sh, logz)

    # ---- final step: one XLU reduce + single store of the scaled loss ----
    @pl.when(step == pl.num_programs(0) - 1)
    def _():
        n_loss_terms = 2 * (ncrops - 1)
        total = jnp.sum(acc_lse[...]) - jnp.sum(acc_qs[...])
        # TODO(synk): an SMEM scalar output would avoid this masked (1,1) store.
        loss_ref[...] = jnp.full((1, 1), 1.0 / (B * n_loss_terms), jnp.float32) * total


def _working_set_bytes(cps, B, D, rows_t, s_item, t_item, c_item):
    lane_d = max(D, 128)
    stu = 2 * cps * B * D * s_item            # double-buffered student blocks
    tch = rows_t * D * t_item                 # raw-teacher scratch (single copy)
    qsc = rows_t * D * 4                      # q0 / q_sum scratch (f32)
    acc = 8 * lane_d * 4 + max(B, 8) * 128 * 4
    ctr = 2 * lane_d * c_item                 # double-buffered center block
    out = lane_d * 4 + 8 * 128 * 4            # tsum + loss output blocks
    return stu + tch + qsc + acc + ctr + out


def dino_loss_forward(student_output, teacher_output, center, teacher_temp, *,
                      ncrops, student_temp=0.1, center_momentum=0.9):
    rows_s, D = student_output.shape
    rows_t, Dt = teacher_output.shape
    assert Dt == D and center.shape == (1, D)
    assert ncrops >= 2, "ncrops must be >= 2 (otherwise n_loss_terms == 0)"
    assert rows_t % 2 == 0
    B = rows_t // 2
    assert rows_s == ncrops * B

    s_item = student_output.dtype.itemsize
    t_item = teacher_output.dtype.itemsize
    c_item = center.dtype.itemsize
    sub_s = max(8, 32 // s_item)   # sublane tile: 8 (f32) / 16 (bf16)
    sub_t = max(8, 32 // t_item)
    assert B % sub_s == 0 and B % sub_t == 0, (
        f"B={B} must be a multiple of the sublane tile "
        f"({sub_s} for student dtype, {sub_t} for teacher dtype)")

    # Small problems: one grid step with every crop resident (no per-step
    # pipeline overhead).  Large problems: one crop per grid step.
    small = _working_set_bytes(ncrops, B, D, rows_t, s_item, t_item, c_item) <= (8 << 20)
    crops_per_step = ncrops if small else 1
    grid = (ncrops // crops_per_step,)
    vmem_limit = int(min(
        max(2 * _working_set_bytes(crops_per_step, B, D, rows_t, s_item, t_item, c_item),
            32 << 20),
        56 << 20))  # stay under v7x's 64 MiB physical VMEM

    kernel = functools.partial(
        _dino_loss_kernel,
        ncrops=ncrops,
        crops_per_step=crops_per_step,
        B=B,
        inv_student_temp=float(1.0 / student_temp))

    loss_out, tsum = pl.pallas_call(
        kernel,
        out_shape=(jax.ShapeDtypeStruct((1, 1), jnp.float32),
                   jax.ShapeDtypeStruct((1, D), jnp.float32)),
        grid_spec=pltpu.PrefetchScalarGridSpec(
            num_scalar_prefetch=0,
            grid=grid,
            in_specs=[
                pl.BlockSpec(memory_space=pltpu.MemorySpace.SMEM),        # 1/teacher_temp
                pl.BlockSpec(memory_space=pl.ANY),                        # teacher (HBM, copied once)
                pl.BlockSpec((crops_per_step * B, D), lambda i: (i, 0)),  # student crop(s)
                pl.BlockSpec((1, D), lambda i: (0, 0)),                   # center (resident)
            ],
            out_specs=(pl.BlockSpec((1, 1), lambda i: (0, 0)),            # loss (final store)
                       pl.BlockSpec((1, D), lambda i: (0, 0))),           # teacher row-sum
            scratch_shapes=[
                pltpu.VMEM((2 * B, D), teacher_output.dtype),   # raw-teacher copy (step 0 only)
                pltpu.VMEM((2 * B, D), jnp.float32),            # [q0 ; q_sum] cache
                pltpu.VMEM((8, D), jnp.float32),                # deferred sum(Q * sh)
                pltpu.VMEM((B, 1), jnp.float32),                # deferred n_v * logZ
                pltpu.SemaphoreType.DMA(()),                    # teacher-copy semaphore
            ],
        ),
        compiler_params=pltpu.CompilerParams(
            dimension_semantics=("arbitrary",),
            vmem_limit_bytes=vmem_limit),
    )(jnp.asarray([1.0 / teacher_temp], jnp.float32),
      teacher_output, student_output, center)

    loss = loss_out[0, 0]
    # TODO(synk): torch.distributed all_reduce not modeled; assume world_size=1.
    batch_center = tsum / rows_t
    new_center = (center.astype(jnp.float32) * center_momentum +
                  batch_center * (1.0 - center_momentum))
    return loss, new_center


if __name__ == "__main__":
    out_dim, ncrops, B = 128, 4, 8
    warmup_teacher_temp, teacher_temp_final = 0.04, 0.07
    warmup_epochs, nepochs = 5, 20
    student_temp, center_momentum = 0.1, 0.9

    # teacher temperature schedule (as in DINOLoss.__init__)
    teacher_temp_schedule = np.concatenate((
        np.linspace(warmup_teacher_temp, teacher_temp_final, warmup_epochs),
        np.ones(nepochs - warmup_epochs) * teacher_temp_final))
    epoch = 3
    temp = float(teacher_temp_schedule[epoch])

    key = jax.random.PRNGKey(0)
    k1, k2 = jax.random.split(key)
    student_output = jax.random.normal(k1, (ncrops * B, out_dim), jnp.float32)
    teacher_output = jax.random.normal(k2, (2 * B, out_dim), jnp.float32)
    center = jnp.zeros((1, out_dim), jnp.float32)   # registered buffer init

    loss, new_center = dino_loss_forward(
        student_output, teacher_output, center, temp,
        ncrops=ncrops, student_temp=student_temp,
        center_momentum=center_momentum)
    jax.block_until_ready((loss, new_center))

    # pure-JAX reference for correctness
    def ref_loss_fn(student_output, teacher_output, center):
        s = student_output / student_temp
        s_chunks = jnp.split(s, ncrops, axis=0)
        t = jax.nn.softmax((teacher_output - center) / temp, axis=-1)
        t_chunks = jnp.split(t, 2, axis=0)
        total, n = 0.0, 0
        for iq, q in enumerate(t_chunks):
            for v in range(ncrops):
                if v == iq:
                    continue
                l = jnp.sum(-q * jax.nn.log_softmax(s_chunks[v], axis=-1), axis=-1)
                total = total + l.mean()
                n += 1
        return total / n

    ref_loss = ref_loss_fn(student_output, teacher_output, center)
    ref_center = (center * center_momentum +
                  (jnp.sum(teacher_output, axis=0, keepdims=True) /
                   teacher_output.shape[0]) * (1.0 - center_momentum))
    assert np.allclose(np.asarray(loss), np.asarray(ref_loss), rtol=1e-5, atol=1e-5)
    assert np.allclose(np.asarray(new_center), np.asarray(ref_center),
                       rtol=1e-5, atol=1e-5)

    print("KERNEL_OK")
</pallas_src>

<mosaic_0001>
module attributes {stable_mosaic.version = 11 : i64} {
  func.func @_dino_loss_kernel(%arg0: i32, %arg1: memref<1xf32, #tpu.memory_space<smem>>, %arg2: memref<16x128xf32, #tpu.memory_space<any>>, %arg3: memref<32x128xf32, #tpu.memory_space<vmem>>, %arg4: memref<1x128xf32, #tpu.memory_space<vmem>>, %arg5: memref<1x1xf32, #tpu.memory_space<vmem>>, %arg6: memref<1x128xf32, #tpu.memory_space<vmem>>, %arg7: memref<16x128xf32, #tpu.memory_space<vmem>>, %arg8: memref<16x128xf32, #tpu.memory_space<vmem>>, %arg9: memref<8x128xf32, #tpu.memory_space<vmem>>, %arg10: memref<8x1xf32, #tpu.memory_space<vmem>>, %arg11: memref<!tpu.dma_semaphore, #tpu.memory_space<semaphore_mem>>) attributes {dimension_semantics = [#tpu.dimension_semantics<arbitrary>], iteration_bounds = array<i64: 1>, scalar_prefetch = 0 : i64, scratch_operands = 5 : i64, tpu.core_type = #tpu.core_type<tc>, window_params = [{transform_indices = @transform_0, window_bounds = array<i64: 1>}, {}, {transform_indices = @transform_2, window_bounds = array<i64: 32, 128>}, {pipeline_mode = #tpu.pipeline_mode<synchronous>, transform_indices = @transform_3, window_bounds = array<i64: 1, 128>}, {pipeline_mode = #tpu.pipeline_mode<synchronous>, transform_indices = @transform_4, window_bounds = array<i64: 1, 1>}, {pipeline_mode = #tpu.pipeline_mode<synchronous>, transform_indices = @transform_5, window_bounds = array<i64: 1, 128>}]} {
    %c0_i32 = arith.constant 0 : i32
    %0 = arith.cmpi eq, %arg0, %c0_i32 : i32
    %1 = arith.extui %0 : i1 to i32
    %c0_i32_0 = arith.constant 0 : i32
    %2 = arith.cmpi ne, %1, %c0_i32_0 : i32
    scf.if %2 {
      tpu.enqueue_dma source(%arg2 : memref<16x128xf32, #tpu.memory_space<any>>) target(%arg7 : memref<16x128xf32, #tpu.memory_space<vmem>>) target_semaphore(%arg11 : memref<!tpu.dma_semaphore, #tpu.memory_space<semaphore_mem>>)
      tpu.wait_dma2 semaphore(%arg11 : memref<!tpu.dma_semaphore, #tpu.memory_space<semaphore_mem>>) src(%arg2 : memref<16x128xf32, #tpu.memory_space<any>>) dst(%arg7 : memref<16x128xf32, #tpu.memory_space<vmem>>)
      %c0_64 = arith.constant 0 : index
      %c0_65 = arith.constant 0 : index
      %92 = vector.load %arg7[%c0_64, %c0_65] : memref<16x128xf32, #tpu.memory_space<vmem>>, vector<16x128xf32>
      %cst_66 = arith.constant dense<0.000000e+00> : vector<128xf32>
      %93 = vector.multi_reduction <add>, %92, %cst_66 [0] : vector<16x128xf32> to vector<128xf32>
      %94 = vector.shape_cast %93 : vector<128xf32> to vector<1x128xf32>
      %c0_67 = arith.constant 0 : index
      %c0_68 = arith.constant 0 : index
      %95 = vector.load %arg6[%c0_67, %c0_68] : memref<1x128xf32, #tpu.memory_space<vmem>>, vector<1x128xf32>
      tpu.vector_store %arg6[%c0_67, %c0_68], %94 {strides = array<i32>} : memref<1x128xf32, #tpu.memory_space<vmem>>, vector<1x128xf32>,
      %c0_69 = arith.constant 0 : index
      %c0_70 = arith.constant 0 : index
      %96 = vector.load %arg4[%c0_69, %c0_70] : memref<1x128xf32, #tpu.memory_space<vmem>>, vector<1x128xf32>
      %97 = vector.broadcast %96 : vector<1x128xf32> to vector<16x128xf32>
      %98 = arith.subf %92, %97 : vector<16x128xf32>
      %c0_71 = arith.constant 0 : index
      %99 = memref.load %arg1[%c0_71] : memref<1xf32, #tpu.memory_space<smem>>
      %100 = vector.broadcast %99 : f32 to vector<16x128xf32>
      %101 = arith.mulf %98, %100 : vector<16x128xf32>
      %cst_72 = arith.constant dense<0xFF800000> : vector<16xf32>
      %102 = vector.multi_reduction <maximumf>, %101, %cst_72 [1] : vector<16x128xf32> to vector<16xf32>
      %103 = vector.shape_cast %102 : vector<16xf32> to vector<16x1xf32>
      %104 = vector.broadcast %103 : vector<16x1xf32> to vector<16x128xf32>
      %105 = arith.subf %101, %104 : vector<16x128xf32>
      %106 = math.exp %105 : vector<16x128xf32>
      %cst_73 = arith.constant dense<0.000000e+00> : vector<16xf32>
      %107 = vector.multi_reduction <add>, %106, %cst_73 [1] : vector<16x128xf32> to vector<16xf32>
      %108 = vector.shape_cast %107 : vector<16xf32> to vector<16x1xf32>
      %cst_74 = arith.constant 1.000000e+00 : f32
      %109 = vector.broadcast %cst_74 : f32 to vector<16x1xf32>
      %110 = arith.divf %109, %108 : vector<16x1xf32>
      %111 = vector.broadcast %110 : vector<16x1xf32> to vector<16x128xf32>
      %112 = arith.mulf %106, %111 : vector<16x128xf32>
      %113 = vector.extract_strided_slice %112 {offsets = [0, 0], sizes = [8, 128], strides = [1, 1]} : vector<16x128xf32> to vector<8x128xf32>
      %c0_75 = arith.constant 0 : index
      %c0_76 = arith.constant 0 : index
      %114 = vector.load %arg8[%c0_75, %c0_76] : memref<16x128xf32, #tpu.memory_space<vmem>>, vector<8x128xf32>
      tpu.vector_store %arg8[%c0_75, %c0_76], %113 {strides = array<i32>} : memref<16x128xf32, #tpu.memory_space<vmem>>, vector<8x128xf32>,
      %115 = vector.extract_strided_slice %112 {offsets = [8, 0], sizes = [8, 128], strides = [1, 1]} : vector<16x128xf32> to vector<8x128xf32>
      %116 = arith.addf %113, %115 : vector<8x128xf32>
      %c8_77 = arith.constant 8 : index
      %c0_78 = arith.constant 0 : index
      %117 = vector.load %arg8[%c8_77, %c0_78] : memref<16x128xf32, #tpu.memory_space<vmem>>, vector<8x128xf32>
      tpu.vector_store %arg8[%c8_77, %c0_78], %116 {strides = array<i32>} : memref<16x128xf32, #tpu.memory_space<vmem>>, vector<8x128xf32>,
      %cst_79 = arith.constant 0.000000e+00 : f32
      %118 = vector.broadcast %cst_79 : f32 to vector<8x128xf32>
      %c0_80 = arith.constant 0 : index
      %c0_81 = arith.constant 0 : index
      %119 = vector.load %arg9[%c0_80, %c0_81] : memref<8x128xf32, #tpu.memory_space<vmem>>, vector<8x128xf32>
      tpu.vector_store %arg9[%c0_80, %c0_81], %118 {strides = array<i32>} : memref<8x128xf32, #tpu.memory_space<vmem>>, vector<8x128xf32>,
      %cst_82 = arith.constant 0.000000e+00 : f32
      %120 = vector.broadcast %cst_82 : f32 to vector<8x1xf32>
      %c0_83 = arith.constant 0 : index
      %c0_84 = arith.constant 0 : index
      %121 = vector.load %arg10[%c0_83, %c0_84] : memref<8x1xf32, #tpu.memory_space<vmem>>, vector<8x1xf32>
      tpu.vector_store %arg10[%c0_83, %c0_84], %120 {strides = array<i32>} : memref<8x1xf32, #tpu.memory_space<vmem>>, vector<8x1xf32>,
    } else {
    }
    %c0 = arith.constant 0 : index
    %c0_1 = arith.constant 0 : index
    %3 = vector.load %arg3[%c0, %c0_1] : memref<32x128xf32, #tpu.memory_space<vmem>>, vector<8x128xf32>
    %cst = arith.constant 1.000000e+01 : f32
    %4 = vector.broadcast %cst : f32 to vector<8x128xf32>
    %5 = arith.mulf %3, %4 : vector<8x128xf32>
    %cst_2 = arith.constant dense<0xFF800000> : vector<8xf32>
    %6 = vector.multi_reduction <maximumf>, %5, %cst_2 [1] : vector<8x128xf32> to vector<8xf32>
    %7 = vector.shape_cast %6 : vector<8xf32> to vector<8x1xf32>
    %8 = vector.broadcast %7 : vector<8x1xf32> to vector<8x128xf32>
    %9 = arith.subf %5, %8 : vector<8x128xf32>
    %10 = math.exp %9 : vector<8x128xf32>
    %cst_3 = arith.constant dense<0.000000e+00> : vector<8xf32>
    %11 = vector.multi_reduction <add>, %10, %cst_3 [1] : vector<8x128xf32> to vector<8xf32>
    %12 = vector.shape_cast %11 : vector<8xf32> to vector<8x1xf32>
    %13 = math.log %12 : vector<8x1xf32>
    %c0_4 = arith.constant 0 : index
    %c0_5 = arith.constant 0 : index
    %14 = vector.load %arg8[%c0_4, %c0_5] : memref<16x128xf32, #tpu.memory_space<vmem>>, vector<8x128xf32>
    %c8 = arith.constant 8 : index
    %c0_6 = arith.constant 0 : index
    %15 = vector.load %arg8[%c8, %c0_6] : memref<16x128xf32, #tpu.memory_space<vmem>>, vector<8x128xf32>
    %16 = arith.subf %15, %14 : vector<8x128xf32>
    %c0_7 = arith.constant 0 : index
    %c0_8 = arith.constant 0 : index
    %17 = vector.load %arg9[%c0_7, %c0_8] : memref<8x128xf32, #tpu.memory_space<vmem>>, vector<8x128xf32>
    %18 = arith.mulf %16, %9 : vector<8x128xf32>
    %19 = arith.addf %17, %18 : vector<8x128xf32>
    %c0_9 = arith.constant 0 : index
    %c0_10 = arith.constant 0 : index
    %20 = vector.load %arg9[%c0_9, %c0_10] : memref<8x128xf32, #tpu.memory_space<vmem>>, vector<8x128xf32>
    tpu.vector_store %arg9[%c0_9, %c0_10], %19 {strides = array<i32>} : memref<8x128xf32, #tpu.memory_space<vmem>>, vector<8x128xf32>,
    %c0_11 = arith.constant 0 : index
    %c0_12 = arith.constant 0 : index
    %21 = vector.load %arg10[%c0_11, %c0_12] : memref<8x1xf32, #tpu.memory_space<vmem>>, vector<8x1xf32>
    %cst_13 = arith.constant 1.000000e+00 : f32
    %22 = vector.broadcast %cst_13 : f32 to vector<8x1xf32>
    %23 = arith.mulf %22, %13 : vector<8x1xf32>
    %24 = arith.addf %21, %23 : vector<8x1xf32>
    %c0_14 = arith.constant 0 : index
    %c0_15 = arith.constant 0 : index
    %25 = vector.load %arg10[%c0_14, %c0_15] : memref<8x1xf32, #tpu.memory_space<vmem>>, vector<8x1xf32>
    tpu.vector_store %arg10[%c0_14, %c0_15], %24 {strides = array<i32>} : memref<8x1xf32, #tpu.memory_space<vmem>>, vector<8x1xf32>,
    %c8_16 = arith.constant 8 : index
    %c0_17 = arith.constant 0 : index
    %26 = vector.load %arg3[%c8_16, %c0_17] : memref<32x128xf32, #tpu.memory_space<vmem>>, vector<8x128xf32>
    %cst_18 = arith.constant 1.000000e+01 : f32
    %27 = vector.broadcast %cst_18 : f32 to vector<8x128xf32>
    %28 = arith.mulf %26, %27 : vector<8x128xf32>
    %cst_19 = arith.constant dense<0xFF800000> : vector<8xf32>
    %29 = vector.multi_reduction <maximumf>, %28, %cst_19 [1] : vector<8x128xf32> to vector<8xf32>
    %30 = vector.shape_cast %29 : vector<8xf32> to vector<8x1xf32>
    %31 = vector.broadcast %30 : vector<8x1xf32> to vector<8x128xf32>
    %32 = arith.subf %28, %31 : vector<8x128xf32>
    %33 = math.exp %32 : vector<8x128xf32>
    %cst_20 = arith.constant dense<0.000000e+00> : vector<8xf32>
    %34 = vector.multi_reduction <add>, %33, %cst_20 [1] : vector<8x128xf32> to vector<8xf32>
    %35 = vector.shape_cast %34 : vector<8xf32> to vector<8x1xf32>
    %36 = math.log %35 : vector<8x1xf32>
    %c0_21 = arith.constant 0 : index
    %c0_22 = arith.constant 0 : index
    %37 = vector.load %arg8[%c0_21, %c0_22] : memref<16x128xf32, #tpu.memory_space<vmem>>, vector<8x128xf32>
    %c0_23 = arith.constant 0 : index
    %c0_24 = arith.constant 0 : index
    %38 = vector.load %arg9[%c0_23, %c0_24] : memref<8x128xf32, #tpu.memory_space<vmem>>, vector<8x128xf32>
    %39 = arith.mulf %37, %32 : vector<8x128xf32>
    %40 = arith.addf %38, %39 : vector<8x128xf32>
    %c0_25 = arith.constant 0 : index
    %c0_26 = arith.constant 0 : index
    %41 = vector.load %arg9[%c0_25, %c0_26] : memref<8x128xf32, #tpu.memory_space<vmem>>, vector<8x128xf32>
    tpu.vector_store %arg9[%c0_25, %c0_26], %40 {strides = array<i32>} : memref<8x128xf32, #tpu.memory_space<vmem>>, vector<8x128xf32>,
    %c0_27 = arith.constant 0 : index
    %c0_28 = arith.constant 0 : index
    %42 = vector.load %arg10[%c0_27, %c0_28] : memref<8x1xf32, #tpu.memory_space<vmem>>, vector<8x1xf32>
    %cst_29 = arith.constant 1.000000e+00 : f32
    %43 = vector.broadcast %cst_29 : f32 to vector<8x1xf32>
    %44 = arith.mulf %43, %36 : vector<8x1xf32>
    %45 = arith.addf %42, %44 : vector<8x1xf32>
    %c0_30 = arith.constant 0 : index
    %c0_31 = arith.constant 0 : index
    %46 = vector.load %arg10[%c0_30, %c0_31] : memref<8x1xf32, #tpu.memory_space<vmem>>, vector<8x1xf32>
    tpu.vector_store %arg10[%c0_30, %c0_31], %45 {strides = array<i32>} : memref<8x1xf32, #tpu.memory_space<vmem>>, vector<8x1xf32>,
    %c16 = arith.constant 16 : index
    %c0_32 = arith.constant 0 : index
    %47 = vector.load %arg3[%c16, %c0_32] : memref<32x128xf32, #tpu.memory_space<vmem>>, vector<8x128xf32>
    %cst_33 = arith.constant 1.000000e+01 : f32
    %48 = vector.broadcast %cst_33 : f32 to vector<8x128xf32>
    %49 = arith.mulf %47, %48 : vector<8x128xf32>
    %cst_34 = arith.constant dense<0xFF800000> : vector<8xf32>
    %50 = vector.multi_reduction <maximumf>, %49, %cst_34 [1] : vector<8x128xf32> to vector<8xf32>
    %51 = vector.shape_cast %50 : vector<8xf32> to vector<8x1xf32>
    %52 = vector.broadcast %51 : vector<8x1xf32> to vector<8x128xf32>
    %53 = arith.subf %49, %52 : vector<8x128xf32>
    %54 = math.exp %53 : vector<8x128xf32>
    %cst_35 = arith.constant dense<0.000000e+00> : vector<8xf32>
    %55 = vector.multi_reduction <add>, %54, %cst_35 [1] : vector<8x128xf32> to vector<8xf32>
    %56 = vector.shape_cast %55 : vector<8xf32> to vector<8x1xf32>
    %57 = math.log %56 : vector<8x1xf32>
    %c8_36 = arith.constant 8 : index
    %c0_37 = arith.constant 0 : index
    %58 = vector.load %arg8[%c8_36, %c0_37] : memref<16x128xf32, #tpu.memory_space<vmem>>, vector<8x128xf32>
    %c0_38 = arith.constant 0 : index
    %c0_39 = arith.constant 0 : index
    %59 = vector.load %arg9[%c0_38, %c0_39] : memref<8x128xf32, #tpu.memory_space<vmem>>, vector<8x128xf32>
    %60 = arith.mulf %58, %53 : vector<8x128xf32>
    %61 = arith.addf %59, %60 : vector<8x128xf32>
    %c0_40 = arith.constant 0 : index
    %c0_41 = arith.constant 0 : index
    %62 = vector.load %arg9[%c0_40, %c0_41] : memref<8x128xf32, #tpu.memory_space<vmem>>, vector<8x128xf32>
    tpu.vector_store %arg9[%c0_40, %c0_41], %61 {strides = array<i32>} : memref<8x128xf32, #tpu.memory_space<vmem>>, vector<8x128xf32>,
    %c0_42 = arith.constant 0 : index
    %c0_43 = arith.constant 0 : index
    %63 = vector.load %arg10[%c0_42, %c0_43] : memref<8x1xf32, #tpu.memory_space<vmem>>, vector<8x1xf32>
    %cst_44 = arith.constant 2.000000e+00 : f32
    %64 = vector.broadcast %cst_44 : f32 to vector<8x1xf32>
    %65 = arith.mulf %64, %57 : vector<8x1xf32>
    %66 = arith.addf %63, %65 : vector<8x1xf32>
    %c0_45 = arith.constant 0 : index
    %c0_46 = arith.constant 0 : index
    %67 = vector.load %arg10[%c0_45, %c0_46] : memref<8x1xf32, #tpu.memory_space<vmem>>, vector<8x1xf32>
    tpu.vector_store %arg10[%c0_45, %c0_46], %66 {strides = array<i32>} : memref<8x1xf32, #tpu.memory_space<vmem>>, vector<8x1xf32>,
    %c24 = arith.constant 24 : index
    %c0_47 = arith.constant 0 : index
    %68 = vector.load %arg3[%c24, %c0_47] : memref<32x128xf32, #tpu.memory_space<vmem>>, vector<8x128xf32>
    %cst_48 = arith.constant 1.000000e+01 : f32
    %69 = vector.broadcast %cst_48 : f32 to vector<8x128xf32>
    %70 = arith.mulf %68, %69 : vector<8x128xf32>
    %cst_49 = arith.constant dense<0xFF800000> : vector<8xf32>
    %71 = vector.multi_reduction <maximumf>, %70, %cst_49 [1] : vector<8x128xf32> to vector<8xf32>
    %72 = vector.shape_cast %71 : vector<8xf32> to vector<8x1xf32>
    %73 = vector.broadcast %72 : vector<8x1xf32> to vector<8x128xf32>
    %74 = arith.subf %70, %73 : vector<8x128xf32>
    %75 = math.exp %74 : vector<8x128xf32>
    %cst_50 = arith.constant dense<0.000000e+00> : vector<8xf32>
    %76 = vector.multi_reduction <add>, %75, %cst_50 [1] : vector<8x128xf32> to vector<8xf32>
    %77 = vector.shape_cast %76 : vector<8xf32> to vector<8x1xf32>
    %78 = math.log %77 : vector<8x1xf32>
    %c8_51 = arith.constant 8 : index
    %c0_52 = arith.constant 0 : index
    %79 = vector.load %arg8[%c8_51, %c0_52] : memref<16x128xf32, #tpu.memory_space<vmem>>, vector<8x128xf32>
    %c0_53 = arith.constant 0 : index
    %c0_54 = arith.constant 0 : index
    %80 = vector.load %arg9[%c0_53, %c0_54] : memref<8x128xf32, #tpu.memory_space<vmem>>, vector<8x128xf32>
    %81 = arith.mulf %79, %74 : vector<8x128xf32>
    %82 = arith.addf %80, %81 : vector<8x128xf32>
    %c0_55 = arith.constant 0 : index
    %c0_56 = arith.constant 0 : index
    %83 = vector.load %arg9[%c0_55, %c0_56] : memref<8x128xf32, #tpu.memory_space<vmem>>, vector<8x128xf32>
    tpu.vector_store %arg9[%c0_55, %c0_56], %82 {strides = array<i32>} : memref<8x128xf32, #tpu.memory_space<vmem>>, vector<8x128xf32>,
    %c0_57 = arith.constant 0 : index
    %c0_58 = arith.constant 0 : index
    %84 = vector.load %arg10[%c0_57, %c0_58] : memref<8x1xf32, #tpu.memory_space<vmem>>, vector<8x1xf32>
    %cst_59 = arith.constant 2.000000e+00 : f32
    %85 = vector.broadcast %cst_59 : f32 to vector<8x1xf32>
    %86 = arith.mulf %85, %78 : vector<8x1xf32>
    %87 = arith.addf %84, %86 : vector<8x1xf32>
    %c0_60 = arith.constant 0 : index
    %c0_61 = arith.constant 0 : index
    %88 = vector.load %arg10[%c0_60, %c0_61] : memref<8x1xf32, #tpu.memory_space<vmem>>, vector<8x1xf32>
    tpu.vector_store %arg10[%c0_60, %c0_61], %87 {strides = array<i32>} : memref<8x1xf32, #tpu.memory_space<vmem>>, vector<8x1xf32>,
    %c0_i32_62 = arith.constant 0 : i32
    %89 = arith.cmpi eq, %arg0, %c0_i32_62 : i32
    %90 = arith.extui %89 : i1 to i32
    %c0_i32_63 = arith.constant 0 : i32
    %91 = arith.cmpi ne, %90, %c0_i32_63 : i32
    scf.if %91 {
      %c0_64 = arith.constant 0 : index
      %c0_65 = arith.constant 0 : index
      %92 = vector.load %arg10[%c0_64, %c0_65] : memref<8x1xf32, #tpu.memory_space<vmem>>, vector<8x1xf32>
      %93 = vector.shape_cast %92 : vector<8x1xf32> to vector<1x8x1xf32>
      %cst_66 = arith.constant dense<0.000000e+00> : vector<1xf32>
      %94 = vector.multi_reduction <add>, %93, %cst_66 [1, 2] : vector<1x8x1xf32> to vector<1xf32>
      %95 = vector.shape_cast %94 : vector<1xf32> to vector<1x1x1xf32>
      %96 = vector.extract %95[0, 0, 0] : f32 from vector<1x1x1xf32>
      %c0_67 = arith.constant 0 : index
      %c0_68 = arith.constant 0 : index
      %97 = vector.load %arg9[%c0_67, %c0_68] : memref<8x128xf32, #tpu.memory_space<vmem>>, vector<8x128xf32>
      %98 = vector.shape_cast %97 : vector<8x128xf32> to vector<1x8x128xf32>
      %cst_69 = arith.constant dense<0.000000e+00> : vector<1xf32>
      %99 = vector.multi_reduction <add>, %98, %cst_69 [1, 2] : vector<1x8x128xf32> to vector<1xf32>
      %100 = vector.shape_cast %99 : vector<1xf32> to vector<1x1x1xf32>
      %101 = vector.extract %100[0, 0, 0] : f32 from vector<1x1x1xf32>
      %102 = arith.subf %96, %101 : f32
      %cst_70 = arith.constant 0.020833334 : f32
      %103 = vector.broadcast %cst_70 : f32 to vector<1x1xf32>
      %104 = vector.broadcast %102 : f32 to vector<1x1xf32>
      %105 = arith.mulf %103, %104 : vector<1x1xf32>
      %c0_71 = arith.constant 0 : index
      %c0_72 = arith.constant 0 : index
      %106 = vector.load %arg5[%c0_71, %c0_72] : memref<1x1xf32, #tpu.memory_space<vmem>>, vector<1x1xf32>
      tpu.vector_store %arg5[%c0_71, %c0_72], %105 {strides = array<i32>} : memref<1x1xf32, #tpu.memory_space<vmem>>, vector<1x1xf32>,
    } else {
    }
    return
  }
  func.func @transform_0(%arg0: i32) -> i32 {
    %c0_i32 = arith.constant 0 : i32
    %c0_i32_0 = arith.constant 0 : i32
    return %c0_i32 : i32
  }
  func.func @transform_2(%arg0: i32) -> (i32, i32) {
    %c0_i32 = arith.constant 0 : i32
    %c0_i32_0 = arith.constant 0 : i32
    return %arg0, %c0_i32 : i32, i32
  }
  func.func @transform_3(%arg0: i32) -> (i32, i32) {
    %c0_i32 = arith.constant 0 : i32
    %c0_i32_0 = arith.constant 0 : i32
    %c0_i32_1 = arith.constant 0 : i32
    return %c0_i32, %c0_i32_0 : i32, i32
  }
  func.func @transform_4(%arg0: i32) -> (i32, i32) {
    %c0_i32 = arith.constant 0 : i32
    %c0_i32_0 = arith.constant 0 : i32
    %c0_i32_1 = arith.constant 0 : i32
    return %c0_i32, %c0_i32_0 : i32, i32
  }
  func.func @transform_5(%arg0: i32) -> (i32, i32) {
    %c0_i32 = arith.constant 0 : i32
    %c0_i32_0 = arith.constant 0 : i32
    %c0_i32_1 = arith.constant 0 : i32
    return %c0_i32, %c0_i32_0 : i32, i32
  }
}

</mosaic_0001>

<llo_original>
// kernel: tpu_custom_call.1
$region0: #{tpu_custom_call.1}
  #allocation0 [shape = 'u32[]', space=smem, size = 0x4, offset = 0x4, fixed_abs, tag = 'smem constant byte address 0x4 - core index']
  #allocation1 [shape = 'u32[144,128]{1,0:T(1,128)}', space=vmem, size = 0x12000, scoped, tag = 'internal scratch']
  #allocation2 [shape = 'f32[16,128]{1,0:T(8,128)}', space=vmem, size = 0x2000, scoped, tag = 'scratch operand']
  #allocation3 [shape = 'f32[16,128]{1,0:T(8,128)}', space=vmem, size = 0x2000, scoped, tag = 'scratch operand']
  #allocation4 [shape = 'f32[8,128]{1,0:T(8,128)}', space=vmem, size = 0x1000, scoped, tag = 'scratch operand']
  #allocation5 [shape = 'f32[8,1]{1,0:T(8,128)}', space=vmem, size = 0x1000, scoped, tag = 'scratch operand']
  #allocation6 [shape = 's32[1]{0}', space=sflag, size = 0x4, scoped, tag = 'scratch operand']
  #allocation7 [shape = 'f32[1]{0:T(128)S(6)}', space=smem, size = 0x200, scoped, tag = 'scoped memory for tpu_custom_call.1']
  #allocation14 [shape = 's32[]', space=sflag, size = 0x4, offset = 0, fixed_abs, tag = 'sflag constant byte address 0x0 - dummy sync flag']
  #allocation15 [shape = 's32[]', space=sflag, size = 0x4, offset = 0, fixed_abs, tag = 'sflag constant byte address 0x0 - dummy sync flag']
  #allocation16 [shape = 'u32[]', space=smem, size = 0x4, offset = 0x44, fixed_abs, tag = 'smem constant byte address 0x44 - assertion arg 0']
  #allocation17 [shape = 'u32[]', space=smem, size = 0x4, offset = 0x48, fixed_abs, tag = 'smem constant byte address 0x48 - assertion arg 1']
  %s0 = inlined_call_operand.<no memory space> [shape: f32[1], index: 0, kind: input, shape index: {}]
  %s1 = inlined_call_operand.hbm [shape: f32[16,128], index: 1, kind: input, shape index: {}]
  %s2 = inlined_call_operand.hbm [shape: f32[32,128], index: 2, kind: input, shape index: {}]
  %s3 = inlined_call_operand.vmem [shape: f32[1,128], index: 3, kind: input, shape index: {}]
  %s4 = inlined_call_operand.hbm [shape: f32[1,1], index: 4, kind: output, shape index: {0}]
  %s5 = inlined_call_operand.hbm [shape: f32[1,128], index: 5, kind: output, shape index: {1}]
  %6 = xla_tuple %s4, %s5
  %s7 = sld [smem:[#allocation0]]
  $region46: #{tpu_custom_call.1} parent=0
    _
  %s9 = ssub.s32 1, %s7
  %s10 = scalar_select 0, %s9, %s7
  %11 = sst [smem:[#allocation7]] %s0
  $region1: #{tpu_custom_call.1} parent=0
    #allocation8 [shape = 'u8[16384]{0}', space=vmem, size = 0x4000, scoped, tag = 'input window, operand 2, single buffered']
    #allocation9 [shape = 's32[1]{0}', space=sflag, size = 0x4, scoped, tag = 'scoped memory for tpu_custom_call.1']
    #allocation10 [shape = 's32[1]{0}', space=sflag, size = 0x4, scoped, tag = 'scoped memory for tpu_custom_call.1']
    #allocation11 [shape = 'u8[512]{0}', space=vmem, size = 0x400, scoped, tag = 'output window, operand 0, single buffered']
    #allocation12 [shape = 'u8[512]{0}', space=vmem, size = 0x400, scoped, tag = 'output window, operand 1, single buffered']
    #allocation13 [shape = 's32[1]{0}', space=sflag, size = 0x4, scoped, tag = 'scoped memory for tpu_custom_call.1']
    %12 = vsyncpa [#allocation9], 0
    %13 = vsyncpa [#allocation10], 0
    %14 = vsyncpa [#allocation13], 0
    // Predicated region
    $region2: #{tpu_custom_call.1} parent=1 // pred_check
      _
    $region3: #{tpu_custom_call.1} parent=1 // pred_check_branch
      %16 = sbr.rel (0) target = $region5
    $region4: #{tpu_custom_call.1} parent=1 // pred_region
      _
    $region5: #{tpu_custom_call.1} parent=1 // pred_fallthru
      _
    // Predicated region
    $region6: #{tpu_custom_call.1} parent=1 // pred_check
      _
    $region7: #{tpu_custom_call.1} parent=1 // pred_check_branch
      %18 = sbr.rel (0) target = $region9
    $region8: #{tpu_custom_call.1} parent=1 // pred_region
      %s20 = ssub.s32 512, 512
      %21 = vsyncadd [#allocation9], %s20
      %s22 = sshll.u32 [#allocation8], 4
      %s23 = int_to_ptr.vmem [resolvable:$true] %s22
      %28 = dma.hbm_to_vmem [thread:$0]  %s2, 512, %s23, [#allocation9], 128, 128, 8
    $region9: #{tpu_custom_call.1} parent=1 // pred_fallthru
      _
    // Predicated region
    $region10: #{tpu_custom_call.1} parent=1 // pred_check
      _
    $region11: #{tpu_custom_call.1} parent=1 // pred_check_branch
      %30 = sbr.rel (0) target = $region13
    $region12: #{tpu_custom_call.1} parent=1 // pred_region
      _
    $region13: #{tpu_custom_call.1} parent=1 // pred_fallthru
      _
    // Predicated region
    $region14: #{tpu_custom_call.1} parent=1 // pred_check
      _
    $region15: #{tpu_custom_call.1} parent=1 // pred_check_branch
      %32 = sbr.rel (0) target = $region17
    $region16: #{tpu_custom_call.1} parent=1 // pred_region
      %33 = dma.done [#allocation9], 512
    $region17: #{tpu_custom_call.1} parent=1 // pred_fallthru
      _
    %p34 = scmp.eq.s32.totalorder 0, 0
    // Predicated region
    $region18: #{tpu_custom_call.1} parent=1 // pred_check
      %p35 = pneg %p34
    $region19: #{tpu_custom_call.1} parent=1 // pred_check_branch
      %37 = sbr.rel (%p35) target = $region21
    $region20: #{tpu_custom_call.1} parent=1 // pred_region
      // Predicated region
      $region22: #{tpu_custom_call.1} parent=20 // pred_check
        _
      $region23: #{tpu_custom_call.1} parent=20 // pred_check_branch
        %39 = sbr.rel target = $region25
      $region24: #{tpu_custom_call.1} parent=20 // pred_region
        %40 = sst [smem:[#allocation16]] [#allocation15]
        %41 = sst [smem:[#allocation17]] [#allocation14]
      $region25: #{tpu_custom_call.1} parent=20 // pred_fallthru
        _
      %43 = shalt.err (0)
      %s45 = sshll.u32 [#allocation2], 4
      %s46 = int_to_ptr.vmem [resolvable:$true] %s45
      %48 = dma.hbm_to_vmem [thread:$0]  %s1, 256, %s46, [#allocation6]
      %s49 = smul.u32 16, 1
      %s50 = sshll.u32 %s49, 4
      %51 = dma.done [#allocation6], %s50
      %v52 = vld [vmem:[#allocation2] sm:$0xff]
      %v53 = vld [vmem:[#allocation2 + $0x8] sm:$0xff]
      %v54 = vadd.f32 %v52, %v53
      %v55 = vrot.slane %v54, 4
      %v56 = vadd.f32 %v54, %v55
      %v57 = vrot.slane %v56, 2
      %v58 = vadd.f32 %v56, %v57
      %v59 = vrot.slane %v58, 1
      %v60 = vadd.f32 %v58, %v59
      %61 = vst [vmem:[#allocation12] sm:$0x1] %v60
      %v62 = vld [vmem:[%s3] sm:$0x1]
      %v64 = vlaneseq
      %v65 = vshrl.u32 %v64, 7
      %v66 = vsub.s32 0, %v65
      %v67 = vrot.slane %v62, %v66
      %v69 = vsub.f32 %v52, %v67
      %v70 = vsub.f32 %v53, %v67
      %s71 = sld [smem:[#allocation7]]
      %v72 = vstv %s71
      %v73 = vmul.f32 %v69, %v72
      %v74 = vmul.f32 %v70, %v72
      %75 = vmax.xlane.f32.xlu0 %v73
      %v76 = vpop.xlane.xlu0 %75
      %77 = vmax.xlane.f32.xlu0 %v74
      %v78 = vpop.xlane.xlu0 %77
      %v79 = vsub.f32 %v73, %v76
      %v80 = vsub.f32 %v74, %v78
      %v81 = vmul.f32 %v79, 1.442695
      %v82 = vpow.pop %v81
      %v83 = vmul.f32 %v80, 1.442695
      %v84 = vpow.pop %v83
      %85 = vadd.xlane.f32.xlu0 %v82
      %v86 = vpop.xlane.xlu0 %85
      %87 = vadd.xlane.f32.xlu0 %v84
      %v88 = vpop.xlane.xlu0 %87
      %v89 = vrcp.pop %v86
      %v90 = vmul.f32 1.0, %v89
      %v91 = vrcp.pop %v88
      %v92 = vmul.f32 1.0, %v91
      %v93 = vmul.f32 %v82, %v90
      %v94 = vmul.f32 %v84, %v92
      %95 = vst [vmem:[#allocation3] sm:$0xff] %v93
      %v96 = vadd.f32 %v93, %v94
      %97 = vst [vmem:[#allocation3 + $0x8] sm:$0xff] %v96
      %98 = vst [vmem:[#allocation4] sm:$0xff] 0.0
      %vm99 = vcmask 7168
      %100 = vst.msk [vmem:[#allocation5] sm:$0xff] %vm99, 0.0
    $region21: #{tpu_custom_call.1} parent=1 // pred_fallthru
      _
    %v101 = vld [vmem:[#allocation8] sm:$0xff]
    %v102 = vmul.f32 %v101, 10.0
    %103 = vmax.xlane.f32.xlu0 %v102
    %v104 = vpop.xlane.xlu0 %103
    %v105 = vsub.f32 %v102, %v104
    %v106 = vmul.f32 %v105, 1.442695
    %v107 = vpow.pop %v106
    %108 = vadd.xlane.f32.xlu0 %v107
    %v109 = vpop.xlane.xlu0 %108
    %v110 = vlog2.pop %v109
    %v111 = vmul.f32 %v110, 0.6931472
    %v112 = vld [vmem:[#allocation3] sm:$0xff]
    %v113 = vld [vmem:[#allocation3 + $0x8] sm:$0xff]
    %v114 = vsub.f32 %v113, %v112
    %v115 = vld [vmem:[#allocation4] sm:$0xff]
    %v116 = vmul.f32 %v114, %v105
    %v117 = vadd.f32 %v115, %v116
    %118 = vst [vmem:[#allocation4] sm:$0xff] %v117
    %v119 = vld [vmem:[#allocation5] sm:$0xff]
    %v120 = vadd.f32 %v119, %v111
    %vm121 = vcmask 7168
    %122 = vst.msk [vmem:[#allocation5] sm:$0xff] %vm121, %v120
    %v123 = vld [vmem:[#allocation8 + $0x8] sm:$0xff]
    %v124 = vmul.f32 %v123, 10.0
    %125 = vmax.xlane.f32.xlu0 %v124
    %v126 = vpop.xlane.xlu0 %125
    %v127 = vsub.f32 %v124, %v126
    %v128 = vmul.f32 %v127, 1.442695
    %v129 = vpow.pop %v128
    %130 = vadd.xlane.f32.xlu0 %v129
    %v131 = vpop.xlane.xlu0 %130
    %v132 = vlog2.pop %v131
    %v133 = vmul.f32 %v132, 0.6931472
    %v134 = vld [vmem:[#allocation3] sm:$0xff]
    %v135 = vld [vmem:[#allocation4] sm:$0xff]
    %v136 = vmul.f32 %v134, %v127
    %v137 = vadd.f32 %v135, %v136
    %138 = vst [vmem:[#allocation4] sm:$0xff] %v137
    %v139 = vld [vmem:[#allocation5] sm:$0xff]
    %v140 = vadd.f32 %v139, %v133
    %141 = vst.msk [vmem:[#allocation5] sm:$0xff] %vm121, %v140
    %v142 = vld [vmem:[#allocation8 + $0x10] sm:$0xff]
    %v143 = vmul.f32 %v142, 10.0
    %144 = vmax.xlane.f32.xlu0 %v143
    %v145 = vpop.xlane.xlu0 %144
    %v146 = vsub.f32 %v143, %v145
    %v147 = vmul.f32 %v146, 1.442695
    %v148 = vpow.pop %v147
    %149 = vadd.xlane.f32.xlu0 %v148
    %v150 = vpop.xlane.xlu0 %149
    %v151 = vlog2.pop %v150
    %v152 = vmul.f32 %v151, 0.6931472
    %v153 = vld [vmem:[#allocation3 + $0x8] sm:$0xff]
    %v154 = vld [vmem:[#allocation4] sm:$0xff]
    %v155 = vmul.f32 %v153, %v146
    %v156 = vadd.f32 %v154, %v155
    %157 = vst [vmem:[#allocation4] sm:$0xff] %v156
    %v158 = vld [vmem:[#allocation5] sm:$0xff]
    %v159 = vmul.f32 %v152, 2.0
    %v160 = vadd.f32 %v158, %v159
    %161 = vst.msk [vmem:[#allocation5] sm:$0xff] %vm121, %v160
    %v162 = vld [vmem:[#allocation8 + $0x18] sm:$0xff]
    %v163 = vmul.f32 %v162, 10.0
    %164 = vmax.xlane.f32.xlu0 %v163
    %v165 = vpop.xlane.xlu0 %164
    %v166 = vsub.f32 %v163, %v165
    %v167 = vmul.f32 %v166, 1.442695
    %v168 = vpow.pop %v167
    %169 = vadd.xlane.f32.xlu0 %v168
    %v170 = vpop.xlane.xlu0 %169
    %v171 = vlog2.pop %v170
    %v172 = vmul.f32 %v171, 0.6931472
    %v173 = vld [vmem:[#allocation3 + $0x8] sm:$0xff]
    %v174 = vld [vmem:[#allocation4] sm:$0xff]
    %v175 = vmul.f32 %v173, %v166
    %v176 = vadd.f32 %v174, %v175
    %177 = vst [vmem:[#allocation4] sm:$0xff] %v176
    %v178 = vld [vmem:[#allocation5] sm:$0xff]
    %v179 = vmul.f32 %v172, 2.0
    %v180 = vadd.f32 %v178, %v179
    %181 = vst.msk [vmem:[#allocation5] sm:$0xff] %vm121, %v180
    // Predicated region
    $region26: #{tpu_custom_call.1} parent=1 // pred_check
      %p182 = pneg %p34
    $region27: #{tpu_custom_call.1} parent=1 // pred_check_branch
      %184 = sbr.rel (%p182) target = $region29
    $region28: #{tpu_custom_call.1} parent=1 // pred_region
      %v185 = vld [vmem:[#allocation5] sm:$0xff]
      %v186 = vsel %vm121, %v185, 0.0
      %187 = vadd.xlane.f32.xlu0 %v186
      %v188 = vpop.xlane.xlu0 %187
      %v189 = vrot.slane %v188, 4
      %v190 = vadd.f32 %v188, %v189
      %v191 = vrot.slane %v190, 2
      %v192 = vadd.f32 %v190, %v191
      %v193 = vrot.slane %v192, 1
      %v194 = vadd.f32 %v192, %v193
      %s195 = vtos %v194
      %v196 = vld [vmem:[#allocation4] sm:$0xff]
      %197 = vadd.xlane.f32.xlu0 %v196
      %v198 = vpop.xlane.xlu0 %197
      %v199 = vrot.slane %v198, 4
      %v200 = vadd.f32 %v198, %v199
      %v201 = vrot.slane %v200, 2
      %v202 = vadd.f32 %v200, %v201
      %v203 = vrot.slane %v202, 1
      %v204 = vadd.f32 %v202, %v203
      %s205 = vtos %v204
      %s206 = ssub.f32 %s195, %s205
      %v207 = vstv %s206
      %v208 = vmul.f32 %v207, 0.020833334
      %vm209 = vcmask 0
      %210 = vst.msk [vmem:[#allocation11] sm:$0x1] %vm209, %v208
    $region29: #{tpu_custom_call.1} parent=1 // pred_fallthru
      _
    // Predicated region
    $region30: #{tpu_custom_call.1} parent=1 // pred_check
      _
    $region31: #{tpu_custom_call.1} parent=1 // pred_check_branch
      %212 = sbr.rel (0) target = $region33
    $region32: #{tpu_custom_call.1} parent=1 // pred_region
      %s214 = ssub.s32 16, 16
      %215 = vsyncadd [#allocation10], %s214
      %s217 = sshll.u32 [#allocation11], 4
      %s218 = int_to_ptr.vmem [resolvable:$true] %s217
      %220 = dma.vmem_to_hbm [thread:$0]  %s218, 16, %s4, [#allocation10]
    $region33: #{tpu_custom_call.1} parent=1 // pred_fallthru
      _
    // Predicated region
    $region34: #{tpu_custom_call.1} parent=1 // pred_check
      _
    $region35: #{tpu_custom_call.1} parent=1 // pred_check_branch
      %222 = sbr.rel (0) target = $region37
    $region36: #{tpu_custom_call.1} parent=1 // pred_region
      %s224 = ssub.s32 16, 16
      %225 = vsyncadd [#allocation13], %s224
      %s227 = sshll.u32 [#allocation12], 4
      %s228 = int_to_ptr.vmem [resolvable:$true] %s227
      %230 = dma.vmem_to_hbm [thread:$0]  %s228, 16, %s5, [#allocation13]
    $region37: #{tpu_custom_call.1} parent=1 // pred_fallthru
      _
    // Predicated region
    $region38: #{tpu_custom_call.1} parent=1 // pred_check
      _
    $region39: #{tpu_custom_call.1} parent=1 // pred_check_branch
      %232 = sbr.rel (0) target = $region41
    $region40: #{tpu_custom_call.1} parent=1 // pred_region
      %233 = dma.done [#allocation10], 16
    $region41: #{tpu_custom_call.1} parent=1 // pred_fallthru
      _
    // Predicated region
    $region42: #{tpu_custom_call.1} parent=1 // pred_check
      _
    $region43: #{tpu_custom_call.1} parent=1 // pred_check_branch
      %235 = sbr.rel (0) target = $region45
    $region44: #{tpu_custom_call.1} parent=1 // pred_region
      %236 = dma.done [#allocation13], 16
    $region45: #{tpu_custom_call.1} parent=1 // pred_fallthru
      _
    %237 = vsyncpa [#allocation9], 1
    %238 = vsyncpa [#allocation10], 1
    %239 = vsyncpa [#allocation13], 1
  %240 = vsyncmov [#allocation6]
  %s241 = vpop.sfrf %240
  %p242 = scmp.eq.s32.totalorder %s241, 0
  %p243 = pneg %p242
  %245 = shalt.err (%p243)

</llo_original>
